<compile_context>
chip_gen: v7x
topology: tpu7x:2x2x1
jax: 0.10.0
libtpu: 0.0.40
codegen_flags: <defaults>
</compile_context>

<pallas_src>
import jax
import jax.numpy as jnp
from jax.experimental import pallas as pl
from jax.experimental.pallas import tpu as pltpu

IN_DIM = 28 * 28   # 784
H1, H2 = 128, 64
OUT_DIM = 10


def _round_up(a, m):
    return ((a + m - 1) // m) * m


def _choose_tb(batch):
    """Batch tile: multiple of 16, capped at 1024, and >=2 tiles when B allows it
    so v7x megacore sharding has work for both TensorCores (neutral on v5e/v6e)."""
    tb = _round_up(pl.cdiv(batch, 2), 16)
    return max(16, min(1024, tb))


def mlp_kernel(x_ref, w1_ref, b1_ref, w2_ref, b2_ref, w3_ref, b3_ref, o_ref):
    # In-kernel f32 -> bf16 cast (VPU, hidden under the activation DMA).
    x = x_ref[...].astype(jnp.bfloat16)
    # Layer 1: (TB,784)bf16 @ (784,128)bf16 -> f32 accum, +bias, ReLU, back to bf16.
    h1 = jnp.dot(x, w1_ref[...], preferred_element_type=jnp.float32)
    h1 = jnp.maximum(h1 + b1_ref[...], 0.0).astype(jnp.bfloat16)
    # Layer 2: (TB,128) @ (128,64) -> f32, +bias, ReLU, bf16.
    h2 = jnp.dot(h1, w2_ref[...], preferred_element_type=jnp.float32)
    h2 = jnp.maximum(h2 + b2_ref[...], 0.0).astype(jnp.bfloat16)
    # Layer 3: (TB,64) @ (64,10) -> f32 logits, narrow (TB,10) store.
    out = jnp.dot(h2, w3_ref[...], preferred_element_type=jnp.float32) + b3_ref[...]
    o_ref[...] = out.astype(o_ref.dtype)


def prepare_params(params_f32):
    """One-time parameter prep (outside the per-call forward): weights -> bf16 (in,out),
    biases stay f32 (tiny, added to the f32 accumulator)."""
    w1, b1, w2, b2, w3, b3 = params_f32
    return (w1.astype(jnp.bfloat16), b1,
            w2.astype(jnp.bfloat16), b2,
            w3.astype(jnp.bfloat16), b3)


def mnist_classifier_forward(x_nchw, params):
    """x_nchw: (B, 1, 28, 28) float32. params: prepared (bf16 W as (in,out), f32 b as (1,out)).
    Returns f32 logits (B, 10)."""
    w1, b1, w2, b2, w3, b3 = params
    B = x_nchw.shape[0]

    # nn.Flatten(): free reshape view, kept in f32 — cast happens inside the kernel.
    x = x_nchw.reshape(B, IN_DIM)

    TB = _choose_tb(B)
    num_tiles = pl.cdiv(B, TB)   # ragged last tile is masked by Pallas; no jnp.pad pass.

    # Weights/biases: constant index_map + single buffer -> fetched once, VMEM-resident.
    def resident(shape):
        return pl.BlockSpec(shape, lambda i: tuple(0 for _ in shape),
                            pipeline_mode=pl.Buffered(1))

    flops = 2 * B * (IN_DIM * H1 + H1 * H2 + H2 * OUT_DIM)
    bytes_accessed = (
        B * IN_DIM * 4                                    # f32 activations in
        + (IN_DIM * H1 + H1 * H2 + H2 * OUT_DIM) * 2      # bf16 weights
        + (H1 + H2 + OUT_DIM) * 4                         # f32 biases
        + B * OUT_DIM * 4                                 # f32 logits out
    )

    out = pl.pallas_call(
        mlp_kernel,
        out_shape=jax.ShapeDtypeStruct((B, OUT_DIM), jnp.float32),
        grid=(num_tiles,),
        in_specs=[
            pl.BlockSpec((TB, IN_DIM), lambda i: (i, 0)),   # batch-tiled f32 activations
            resident((IN_DIM, H1)), resident((1, H1)),
            resident((H1, H2)), resident((1, H2)),
            resident((H2, OUT_DIM)), resident((1, OUT_DIM)),
        ],
        out_specs=pl.BlockSpec((TB, OUT_DIM), lambda i: (i, 0)),
        compiler_params=pltpu.CompilerParams(
            dimension_semantics=("parallel",),   # megacore: split batch tiles across TCs (v7x)
            vmem_limit_bytes=32 << 20,           # ~7 MiB needed at TB=1024; safe on v7x's 64 MiB
        ),
        cost_estimate=pl.CostEstimate(
            flops=flops, transcendentals=0, bytes_accessed=bytes_accessed),
    )(x, w1, b1, w2, b2, w3, b3)

    # TODO(synk): intentionally NOT padding K 784->896/1024 nor deepening buffering — the
    # kernel is HBM-bound and those only add bytes / VMEM without adding bandwidth.
    return out


def init_params(key):
    """Deterministic f32 init mimicking PyTorch Linear default (uniform +-1/sqrt(fan_in))."""
    dims = [(IN_DIM, H1), (H1, H2), (H2, OUT_DIM)]
    params = []
    for i, (fan_in, fan_out) in enumerate(dims):
        kw, kb = jax.random.split(jax.random.fold_in(key, i))
        bound = 1.0 / jnp.sqrt(fan_in)
        w = jax.random.uniform(kw, (fan_in, fan_out), jnp.float32, -bound, bound)
        b = jax.random.uniform(kb, (1, fan_out), jnp.float32, -bound, bound)
        params += [w, b]
    return tuple(params)


if __name__ == "__main__":
    key = jax.random.PRNGKey(0)
    params_f32 = init_params(key)
    params = prepare_params(params_f32)   # one-time bf16 weight cast, outside the forward
    # Small batch, MNIST-shaped NCHW input, deterministic.
    B = 8
    x = jax.random.normal(jax.random.fold_in(key, 100), (B, 1, 28, 28), jnp.float32)

    fwd = jax.jit(mnist_classifier_forward)
    logits = fwd(x, params)
    jax.block_until_ready(logits)
    assert logits.shape == (B, OUT_DIM), logits.shape

    # Reference with matched precision (bf16 inputs/weights, f32 accumulation, f32 bias).
    w1, b1, w2, b2, w3, b3 = params_f32
    xf = x.reshape(B, IN_DIM).astype(jnp.bfloat16)
    h1 = jnp.maximum(jnp.dot(xf, w1.astype(jnp.bfloat16),
                             preferred_element_type=jnp.float32) + b1, 0.0).astype(jnp.bfloat16)
    h2 = jnp.maximum(jnp.dot(h1, w2.astype(jnp.bfloat16),
                             preferred_element_type=jnp.float32) + b2, 0.0).astype(jnp.bfloat16)
    ref = jnp.dot(h2, w3.astype(jnp.bfloat16), preferred_element_type=jnp.float32) + b3

    assert jnp.allclose(logits, ref, atol=2e-2, rtol=2e-2), \
        float(jnp.max(jnp.abs(logits - ref)))

    print("KERNEL_OK")
</pallas_src>

<mosaic_0001>
module attributes {stable_mosaic.version = 11 : i64} {
  func.func @mlp_kernel(%arg0: i32, %arg1: memref<16x784xf32, #tpu.memory_space<vmem>>, %arg2: memref<784x128xbf16, #tpu.memory_space<vmem>>, %arg3: memref<1x128xf32, #tpu.memory_space<vmem>>, %arg4: memref<128x64xbf16, #tpu.memory_space<vmem>>, %arg5: memref<1x64xf32, #tpu.memory_space<vmem>>, %arg6: memref<64x10xbf16, #tpu.memory_space<vmem>>, %arg7: memref<1x10xf32, #tpu.memory_space<vmem>>, %arg8: memref<16x10xf32, #tpu.memory_space<vmem>>) attributes {dimension_semantics = [#tpu.dimension_semantics<parallel>], iteration_bounds = array<i64: 1>, scalar_prefetch = 0 : i64, scratch_operands = 0 : i64, tpu.core_type = #tpu.core_type<tc>, window_params = [{transform_indices = @transform_0, window_bounds = array<i64: 16, 784>}, {pipeline_mode = #tpu.pipeline_mode<synchronous>, transform_indices = @transform_1, window_bounds = array<i64: 784, 128>}, {pipeline_mode = #tpu.pipeline_mode<synchronous>, transform_indices = @transform_2, window_bounds = array<i64: 1, 128>}, {pipeline_mode = #tpu.pipeline_mode<synchronous>, transform_indices = @transform_3, window_bounds = array<i64: 128, 64>}, {pipeline_mode = #tpu.pipeline_mode<synchronous>, transform_indices = @transform_4, window_bounds = array<i64: 1, 64>}, {pipeline_mode = #tpu.pipeline_mode<synchronous>, transform_indices = @transform_5, window_bounds = array<i64: 64, 10>}, {pipeline_mode = #tpu.pipeline_mode<synchronous>, transform_indices = @transform_6, window_bounds = array<i64: 1, 10>}, {transform_indices = @transform_7, window_bounds = array<i64: 16, 10>}]} {
    %c0 = arith.constant 0 : index
    %c0_0 = arith.constant 0 : index
    %0 = vector.load %arg1[%c0, %c0_0] : memref<16x784xf32, #tpu.memory_space<vmem>>, vector<16x784xf32>
    %1 = arith.truncf %0 : vector<16x784xf32> to vector<16x784xbf16>
    %c0_1 = arith.constant 0 : index
    %c0_2 = arith.constant 0 : index
    %2 = vector.load %arg2[%c0_1, %c0_2] : memref<784x128xbf16, #tpu.memory_space<vmem>>, vector<784x128xbf16>
    %cst = arith.constant dense<0.000000e+00> : vector<16x128xf32>
    %3 = tpu.matmul %1, %2, %cst {dimension_numbers = #tpu.dot_dimension_numbers<[1], [0], [0], [1], [0, 0, 1, 1], [], []>} : vector<16x784xbf16>, vector<784x128xbf16>, vector<16x128xf32> -> vector<16x128xf32>
    %c0_3 = arith.constant 0 : index
    %c0_4 = arith.constant 0 : index
    %4 = vector.load %arg3[%c0_3, %c0_4] : memref<1x128xf32, #tpu.memory_space<vmem>>, vector<1x128xf32>
    %5 = vector.broadcast %4 : vector<1x128xf32> to vector<16x128xf32>
    %6 = arith.addf %3, %5 : vector<16x128xf32>
    %cst_5 = arith.constant 0.000000e+00 : f32
    %7 = vector.broadcast %cst_5 : f32 to vector<16x128xf32>
    %8 = arith.maximumf %6, %7 : vector<16x128xf32>
    %9 = arith.truncf %8 : vector<16x128xf32> to vector<16x128xbf16>
    %c0_6 = arith.constant 0 : index
    %c0_7 = arith.constant 0 : index
    %10 = vector.load %arg4[%c0_6, %c0_7] : memref<128x64xbf16, #tpu.memory_space<vmem>>, vector<128x64xbf16>
    %cst_8 = arith.constant dense<0.000000e+00> : vector<16x64xf32>
    %11 = tpu.matmul %9, %10, %cst_8 {dimension_numbers = #tpu.dot_dimension_numbers<[1], [0], [0], [1], [0, 0, 1, 1], [], []>} : vector<16x128xbf16>, vector<128x64xbf16>, vector<16x64xf32> -> vector<16x64xf32>
    %c0_9 = arith.constant 0 : index
    %c0_10 = arith.constant 0 : index
    %12 = vector.load %arg5[%c0_9, %c0_10] : memref<1x64xf32, #tpu.memory_space<vmem>>, vector<1x64xf32>
    %13 = vector.broadcast %12 : vector<1x64xf32> to vector<16x64xf32>
    %14 = arith.addf %11, %13 : vector<16x64xf32>
    %cst_11 = arith.constant 0.000000e+00 : f32
    %15 = vector.broadcast %cst_11 : f32 to vector<16x64xf32>
    %16 = arith.maximumf %14, %15 : vector<16x64xf32>
    %17 = arith.truncf %16 : vector<16x64xf32> to vector<16x64xbf16>
    %c0_12 = arith.constant 0 : index
    %c0_13 = arith.constant 0 : index
    %18 = vector.load %arg6[%c0_12, %c0_13] : memref<64x10xbf16, #tpu.memory_space<vmem>>, vector<64x10xbf16>
    %cst_14 = arith.constant dense<0.000000e+00> : vector<16x10xf32>
    %19 = tpu.matmul %17, %18, %cst_14 {dimension_numbers = #tpu.dot_dimension_numbers<[1], [0], [0], [1], [0, 0, 1, 1], [], []>} : vector<16x64xbf16>, vector<64x10xbf16>, vector<16x10xf32> -> vector<16x10xf32>
    %c0_15 = arith.constant 0 : index
    %c0_16 = arith.constant 0 : index
    %20 = vector.load %arg7[%c0_15, %c0_16] : memref<1x10xf32, #tpu.memory_space<vmem>>, vector<1x10xf32>
    %21 = vector.broadcast %20 : vector<1x10xf32> to vector<16x10xf32>
    %22 = arith.addf %19, %21 : vector<16x10xf32>
    %c0_17 = arith.constant 0 : index
    %c0_18 = arith.constant 0 : index
    %23 = vector.load %arg8[%c0_17, %c0_18] : memref<16x10xf32, #tpu.memory_space<vmem>>, vector<16x10xf32>
    tpu.vector_store %arg8[%c0_17, %c0_18], %22 {strides = array<i32>} : memref<16x10xf32, #tpu.memory_space<vmem>>, vector<16x10xf32>,
    return
  }
  func.func @transform_0(%arg0: i32) -> (i32, i32) {
    %c0_i32 = arith.constant 0 : i32
    %c0_i32_0 = arith.constant 0 : i32
    return %arg0, %c0_i32 : i32, i32
  }
  func.func @transform_1(%arg0: i32) -> (i32, i32) {
    %c0_i32 = arith.constant 0 : i32
    %c0_i32_0 = arith.constant 0 : i32
    %c0_i32_1 = arith.constant 0 : i32
    return %c0_i32, %c0_i32_0 : i32, i32
  }
  func.func @transform_2(%arg0: i32) -> (i32, i32) {
    %c0_i32 = arith.constant 0 : i32
    %c0_i32_0 = arith.constant 0 : i32
    %c0_i32_1 = arith.constant 0 : i32
    return %c0_i32, %c0_i32_0 : i32, i32
  }
  func.func @transform_3(%arg0: i32) -> (i32, i32) {
    %c0_i32 = arith.constant 0 : i32
    %c0_i32_0 = arith.constant 0 : i32
    %c0_i32_1 = arith.constant 0 : i32
    return %c0_i32, %c0_i32_0 : i32, i32
  }
  func.func @transform_4(%arg0: i32) -> (i32, i32) {
    %c0_i32 = arith.constant 0 : i32
    %c0_i32_0 = arith.constant 0 : i32
    %c0_i32_1 = arith.constant 0 : i32
    return %c0_i32, %c0_i32_0 : i32, i32
  }
  func.func @transform_5(%arg0: i32) -> (i32, i32) {
    %c0_i32 = arith.constant 0 : i32
    %c0_i32_0 = arith.constant 0 : i32
    %c0_i32_1 = arith.constant 0 : i32
    return %c0_i32, %c0_i32_0 : i32, i32
  }
  func.func @transform_6(%arg0: i32) -> (i32, i32) {
    %c0_i32 = arith.constant 0 : i32
    %c0_i32_0 = arith.constant 0 : i32
    %c0_i32_1 = arith.constant 0 : i32
    return %c0_i32, %c0_i32_0 : i32, i32
  }
  func.func @transform_7(%arg0: i32) -> (i32, i32) {
    %c0_i32 = arith.constant 0 : i32
    %c0_i32_0 = arith.constant 0 : i32
    return %arg0, %c0_i32 : i32, i32
  }
}

</mosaic_0001>

<llo_original>
// kernel: mnist_classifier_forward.1
$region0: #{mnist_classifier_forward.1}
  #allocation0 [shape = 'u32[]', space=smem, size = 0x4, offset = 0x4, fixed_abs, tag = 'smem constant byte address 0x4 - core index']
  #allocation1 [shape = 'u32[144,128]{1,0:T(1,128)}', space=vmem, size = 0x12000, scoped, tag = 'internal scratch']
  %s0 = inlined_call_operand.vmem [shape: f32[8,784], index: 0, kind: input, shape index: {}]
  %s1 = inlined_call_operand.vmem [shape: bf16[784,128], index: 1, kind: input, shape index: {}]
  %s2 = inlined_call_operand.vmem [shape: f32[1,128], index: 2, kind: input, shape index: {}]
  %s3 = inlined_call_operand.vmem [shape: bf16[128,64], index: 3, kind: input, shape index: {}]
  %s4 = inlined_call_operand.vmem [shape: f32[1,64], index: 4, kind: input, shape index: {}]
  %s5 = inlined_call_operand.vmem [shape: bf16[64,10], index: 5, kind: input, shape index: {}]
  %s6 = inlined_call_operand.vmem [shape: f32[1,10], index: 6, kind: input, shape index: {}]
  %s7 = inlined_call_operand.hbm [shape: f32[8,10], index: 7, kind: output, shape index: {}]
  %s8 = sld [smem:[#allocation0]]
  $region38: #{mnist_classifier_forward.1} parent=0
    _
  %s10 = ssub.s32 1, %s8
  %s11 = scalar_select 0, %s10, %s8
  $region1: #{mnist_classifier_forward.1} parent=0
    #allocation2 [shape = 'u8[8192]{0}', space=vmem, size = 0x2000, scoped, tag = 'output window, operand 0, single buffered']
    #allocation3 [shape = 's32[1]{0}', space=sflag, size = 0x4, scoped, tag = 'scoped memory for mnist_classifier_forward.1']
    %12 = vsyncpa [#allocation3], 0
    // Predicated region
    $region2: #{mnist_classifier_forward.1} parent=1 // pred_check
      _
    $region3: #{mnist_classifier_forward.1} parent=1 // pred_check_branch
      %14 = sbr.rel (0) target = $region5
    $region4: #{mnist_classifier_forward.1} parent=1 // pred_region
      _
    $region5: #{mnist_classifier_forward.1} parent=1 // pred_fallthru
      _
    // Predicated region
    $region6: #{mnist_classifier_forward.1} parent=1 // pred_check
      _
    $region7: #{mnist_classifier_forward.1} parent=1 // pred_check_branch
      %16 = sbr.rel (0) target = $region9
    $region8: #{mnist_classifier_forward.1} parent=1 // pred_region
      _
    $region9: #{mnist_classifier_forward.1} parent=1 // pred_fallthru
      _
    // Predicated region
    $region10: #{mnist_classifier_forward.1} parent=1 // pred_check
      _
    $region11: #{mnist_classifier_forward.1} parent=1 // pred_check_branch
      %18 = sbr.rel (0) target = $region13
    $region12: #{mnist_classifier_forward.1} parent=1 // pred_region
      _
    $region13: #{mnist_classifier_forward.1} parent=1 // pred_fallthru
      _
    // Predicated region
    $region14: #{mnist_classifier_forward.1} parent=1 // pred_check
      _
    $region15: #{mnist_classifier_forward.1} parent=1 // pred_check_branch
      %20 = sbr.rel (0) target = $region17
    $region16: #{mnist_classifier_forward.1} parent=1 // pred_region
      _
    $region17: #{mnist_classifier_forward.1} parent=1 // pred_fallthru
      _
    // Predicated region
    $region18: #{mnist_classifier_forward.1} parent=1 // pred_check
      _
    $region19: #{mnist_classifier_forward.1} parent=1 // pred_check_branch
      %22 = sbr.rel (0) target = $region21
    $region20: #{mnist_classifier_forward.1} parent=1 // pred_region
      _
    $region21: #{mnist_classifier_forward.1} parent=1 // pred_fallthru
      _
    // Predicated region
    $region22: #{mnist_classifier_forward.1} parent=1 // pred_check
      _
    $region23: #{mnist_classifier_forward.1} parent=1 // pred_check_branch
      %24 = sbr.rel (0) target = $region25
    $region24: #{mnist_classifier_forward.1} parent=1 // pred_region
      _
    $region25: #{mnist_classifier_forward.1} parent=1 // pred_fallthru
      _
    // Predicated region
    $region26: #{mnist_classifier_forward.1} parent=1 // pred_check
      _
    $region27: #{mnist_classifier_forward.1} parent=1 // pred_check_branch
      %26 = sbr.rel (0) target = $region29
    $region28: #{mnist_classifier_forward.1} parent=1 // pred_region
      _
    $region29: #{mnist_classifier_forward.1} parent=1 // pred_fallthru
      _
    %v28 = vld [vmem:[%s0] sm:$0xff]
    %v29 = vld [vmem:[%s0 + $0x8] sm:$0xff]
    %v30 = vld [vmem:[%s0 + $0x10] sm:$0xff]
    %v31 = vld [vmem:[%s0 + $0x18] sm:$0xff]
    %v32 = vld [vmem:[%s0 + $0x20] sm:$0xff]
    %v33 = vld [vmem:[%s0 + $0x28] sm:$0xff]
    %v34 = vld [vmem:[%s0 + $0x30] sm:$0xff]
    %v35 = vld [vmem:[%s0 + $0x38] sm:$0xff]
    %v36 = vld [vmem:[%s0 + $0x40] sm:$0xff]
    %v37 = vld [vmem:[%s0 + $0x48] sm:$0xff]
    %v38 = vld [vmem:[%s0 + $0x50] sm:$0xff]
    %v39 = vld [vmem:[%s0 + $0x58] sm:$0xff]
    %v40 = vld [vmem:[%s0 + $0x60] sm:$0xff]
    %v41 = vld [vmem:[%s0 + $0x68] sm:$0xff]
    %v42 = vpack.c.bf16 %v35, %v28
    %v43 = vpack.c.bf16 %v36, %v29
    %v44 = vpack.c.bf16 %v37, %v30
    %v45 = vpack.c.bf16 %v38, %v31
    %v46 = vpack.c.bf16 %v39, %v32
    %v47 = vpack.c.bf16 %v40, %v33
    %v48 = vpack.c.bf16 %v41, %v34
    %v49 = vld [vmem:[%s1] sm:$0xf]
    %v50 = vld [vmem:[%s1 + $0x4] sm:$0xf]
    %v51 = vld [vmem:[%s1 + $0x8] sm:$0xf]
    %v52 = vld [vmem:[%s1 + $0xc] sm:$0xf]
    %v53 = vld [vmem:[%s1 + $0x10] sm:$0xf]
    %v54 = vld [vmem:[%s1 + $0x14] sm:$0xf]
    %v55 = vld [vmem:[%s1 + $0x18] sm:$0xf]
    %v56 = vld [vmem:[%s1 + $0x1c] sm:$0xf]
    %v57 = vld [vmem:[%s1 + $0x20] sm:$0xf]
    %v58 = vld [vmem:[%s1 + $0x24] sm:$0xf]
    %v59 = vld [vmem:[%s1 + $0x28] sm:$0xf]
    %v60 = vld [vmem:[%s1 + $0x2c] sm:$0xf]
    %v61 = vld [vmem:[%s1 + $0x30] sm:$0xf]
    %v62 = vld [vmem:[%s1 + $0x34] sm:$0xf]
    %v63 = vld [vmem:[%s1 + $0x38] sm:$0xf]
    %v64 = vld [vmem:[%s1 + $0x3c] sm:$0xf]
    %v65 = vld [vmem:[%s1 + $0x40] sm:$0xf]
    %v66 = vld [vmem:[%s1 + $0x44] sm:$0xf]
    %v67 = vld [vmem:[%s1 + $0x48] sm:$0xf]
    %v68 = vld [vmem:[%s1 + $0x4c] sm:$0xf]
    %v69 = vld [vmem:[%s1 + $0x50] sm:$0xf]
    %v70 = vld [vmem:[%s1 + $0x54] sm:$0xf]
    %v71 = vld [vmem:[%s1 + $0x58] sm:$0xf]
    %v72 = vld [vmem:[%s1 + $0x5c] sm:$0xf]
    %v73 = vld [vmem:[%s1 + $0x60] sm:$0xf]
    %v74 = vld [vmem:[%s1 + $0x64] sm:$0xf]
    %v75 = vld [vmem:[%s1 + $0x68] sm:$0xf]
    %v76 = vld [vmem:[%s1 + $0x6c] sm:$0xf]
    %v77 = vld [vmem:[%s1 + $0x70] sm:$0xf]
    %v78 = vld [vmem:[%s1 + $0x74] sm:$0xf]
    %v79 = vld [vmem:[%s1 + $0x78] sm:$0xf]
    %v80 = vld [vmem:[%s1 + $0x7c] sm:$0xf]
    %v81 = vld [vmem:[%s1 + $0x80] sm:$0xf]
    %v82 = vld [vmem:[%s1 + $0x84] sm:$0xf]
    %v83 = vld [vmem:[%s1 + $0x88] sm:$0xf]
    %v84 = vld [vmem:[%s1 + $0x8c] sm:$0xf]
    %v85 = vld [vmem:[%s1 + $0x90] sm:$0xf]
    %v86 = vld [vmem:[%s1 + $0x94] sm:$0xf]
    %v87 = vld [vmem:[%s1 + $0x98] sm:$0xf]
    %v88 = vld [vmem:[%s1 + $0x9c] sm:$0xf]
    %v89 = vld [vmem:[%s1 + $0xa0] sm:$0xf]
    %v90 = vld [vmem:[%s1 + $0xa4] sm:$0xf]
    %v91 = vld [vmem:[%s1 + $0xa8] sm:$0xf]
    %v92 = vld [vmem:[%s1 + $0xac] sm:$0xf]
    %v93 = vld [vmem:[%s1 + $0xb0] sm:$0xf]
    %v94 = vld [vmem:[%s1 + $0xb4] sm:$0xf]
    %v95 = vld [vmem:[%s1 + $0xb8] sm:$0xf]
    %v96 = vld [vmem:[%s1 + $0xbc] sm:$0xf]
    %v97 = vld [vmem:[%s1 + $0xc0] sm:$0xf]
    %v98 = vld [vmem:[%s1 + $0xc4] sm:$0xf]
    %v99 = vld [vmem:[%s1 + $0xc8] sm:$0xf]
    %v100 = vld [vmem:[%s1 + $0xcc] sm:$0xf]
    %v101 = vld [vmem:[%s1 + $0xd0] sm:$0xf]
    %v102 = vld [vmem:[%s1 + $0xd4] sm:$0xf]
    %v103 = vld [vmem:[%s1 + $0xd8] sm:$0xf]
    %v104 = vld [vmem:[%s1 + $0xdc] sm:$0xf]
    %v105 = vld [vmem:[%s1 + $0xe0] sm:$0xf]
    %v106 = vld [vmem:[%s1 + $0xe4] sm:$0xf]
    %v107 = vld [vmem:[%s1 + $0xe8] sm:$0xf]
    %v108 = vld [vmem:[%s1 + $0xec] sm:$0xf]
    %v109 = vld [vmem:[%s1 + $0xf0] sm:$0xf]
    %v110 = vld [vmem:[%s1 + $0xf4] sm:$0xf]
    %v111 = vld [vmem:[%s1 + $0xf8] sm:$0xf]
    %v112 = vld [vmem:[%s1 + $0xfc] sm:$0xf]
    %v113 = vld [vmem:[%s1 + $0x100] sm:$0xf]
    %v114 = vld [vmem:[%s1 + $0x104] sm:$0xf]
    %v115 = vld [vmem:[%s1 + $0x108] sm:$0xf]
    %v116 = vld [vmem:[%s1 + $0x10c] sm:$0xf]
    %v117 = vld [vmem:[%s1 + $0x110] sm:$0xf]
    %v118 = vld [vmem:[%s1 + $0x114] sm:$0xf]
    %v119 = vld [vmem:[%s1 + $0x118] sm:$0xf]
    %v120 = vld [vmem:[%s1 + $0x11c] sm:$0xf]
    %v121 = vld [vmem:[%s1 + $0x120] sm:$0xf]
    %v122 = vld [vmem:[%s1 + $0x124] sm:$0xf]
    %v123 = vld [vmem:[%s1 + $0x128] sm:$0xf]
    %v124 = vld [vmem:[%s1 + $0x12c] sm:$0xf]
    %v125 = vld [vmem:[%s1 + $0x130] sm:$0xf]
    %v126 = vld [vmem:[%s1 + $0x134] sm:$0xf]
    %v127 = vld [vmem:[%s1 + $0x138] sm:$0xf]
    %v128 = vld [vmem:[%s1 + $0x13c] sm:$0xf]
    %v129 = vld [vmem:[%s1 + $0x140] sm:$0xf]
    %v130 = vld [vmem:[%s1 + $0x144] sm:$0xf]
    %v131 = vld [vmem:[%s1 + $0x148] sm:$0xf]
    %v132 = vld [vmem:[%s1 + $0x14c] sm:$0xf]
    %v133 = vld [vmem:[%s1 + $0x150] sm:$0xf]
    %v134 = vld [vmem:[%s1 + $0x154] sm:$0xf]
    %v135 = vld [vmem:[%s1 + $0x158] sm:$0xf]
    %v136 = vld [vmem:[%s1 + $0x15c] sm:$0xf]
    %v137 = vld [vmem:[%s1 + $0x160] sm:$0xf]
    %v138 = vld [vmem:[%s1 + $0x164] sm:$0xf]
    %v139 = vld [vmem:[%s1 + $0x168] sm:$0xf]
    %v140 = vld [vmem:[%s1 + $0x16c] sm:$0xf]
    %v141 = vld [vmem:[%s1 + $0x170] sm:$0xf]
    %v142 = vld [vmem:[%s1 + $0x174] sm:$0xf]
    %v143 = vld [vmem:[%s1 + $0x178] sm:$0xf]
    %v144 = vld [vmem:[%s1 + $0x17c] sm:$0xf]
    %v145 = vld [vmem:[%s1 + $0x180] sm:$0xf]
    %v146 = vld [vmem:[%s1 + $0x184] sm:$0xf]
    %v147 = vld [vmem:[%s2] sm:$0x1]
    %v149 = vlaneseq
    %v150 = vshrl.u32 %v149, 7
    %v151 = vsub.s32 0, %v150
    %v152 = vrot.slane %v147, %v151
    %v252 = vunpack.c.l.b16 %v49
    %v253 = vunpack.c.l.b16 %v50
    %v254 = vunpack.c.l.b16 %v51
    %v255 = vunpack.c.l.b16 %v52
    %v256 = vunpack.c.l.b16 %v53
    %v257 = vunpack.c.l.b16 %v54
    %v258 = vunpack.c.l.b16 %v55
    %v259 = vunpack.c.l.b16 %v56
    %v260 = vunpack.c.l.b16 %v57
    %v261 = vunpack.c.l.b16 %v58
    %v262 = vunpack.c.l.b16 %v59
    %v263 = vunpack.c.l.b16 %v60
    %v264 = vunpack.c.l.b16 %v61
    %v265 = vunpack.c.l.b16 %v62
    %v266 = vunpack.c.l.b16 %v63
    %v267 = vunpack.c.l.b16 %v64
    %v268 = vunpack.c.l.b16 %v65
    %v269 = vunpack.c.l.b16 %v66
    %v270 = vunpack.c.l.b16 %v67
    %v271 = vunpack.c.l.b16 %v68
    %v272 = vunpack.c.l.b16 %v69
    %v273 = vunpack.c.l.b16 %v70
    %v274 = vunpack.c.l.b16 %v71
    %v275 = vunpack.c.l.b16 %v72
    %v276 = vunpack.c.l.b16 %v73
    %v277 = vunpack.c.l.b16 %v74
    %v278 = vunpack.c.l.b16 %v75
    %v279 = vunpack.c.l.b16 %v76
    %v280 = vunpack.c.l.b16 %v77
    %v281 = vunpack.c.l.b16 %v78
    %v282 = vunpack.c.l.b16 %v79
    %v283 = vunpack.c.l.b16 %v80
    %v284 = vunpack.c.l.b16 %v81
    %v285 = vunpack.c.l.b16 %v82
    %v286 = vunpack.c.l.b16 %v83
    %v287 = vunpack.c.l.b16 %v84
    %v288 = vunpack.c.l.b16 %v85
    %v289 = vunpack.c.l.b16 %v86
    %v290 = vunpack.c.l.b16 %v87
    %v291 = vunpack.c.l.b16 %v88
    %v292 = vunpack.c.l.b16 %v89
    %v293 = vunpack.c.l.b16 %v90
    %v294 = vunpack.c.l.b16 %v91
    %v295 = vunpack.c.l.b16 %v92
    %v296 = vunpack.c.l.b16 %v93
    %v297 = vunpack.c.l.b16 %v94
    %v298 = vunpack.c.l.b16 %v95
    %v299 = vunpack.c.l.b16 %v96
    %v300 = vunpack.c.l.b16 %v97
    %v301 = vunpack.c.l.b16 %v98
    %v302 = vunpack.c.l.b16 %v99
    %v303 = vunpack.c.l.b16 %v100
    %v304 = vunpack.c.l.b16 %v101
    %v305 = vunpack.c.l.b16 %v102
    %v306 = vunpack.c.l.b16 %v103
    %v307 = vunpack.c.l.b16 %v104
    %v308 = vunpack.c.l.b16 %v105
    %v309 = vunpack.c.l.b16 %v106
    %v310 = vunpack.c.l.b16 %v107
    %v311 = vunpack.c.l.b16 %v108
    %v312 = vunpack.c.l.b16 %v109
    %v313 = vunpack.c.l.b16 %v110
    %v314 = vunpack.c.l.b16 %v111
    %v315 = vunpack.c.l.b16 %v112
    %v316 = vunpack.c.l.b16 %v113
    %v317 = vunpack.c.l.b16 %v114
    %v318 = vunpack.c.l.b16 %v115
    %v319 = vunpack.c.l.b16 %v116
    %v320 = vunpack.c.l.b16 %v117
    %v321 = vunpack.c.l.b16 %v118
    %v322 = vunpack.c.l.b16 %v119
    %v323 = vunpack.c.l.b16 %v120
    %v324 = vunpack.c.l.b16 %v121
    %v325 = vunpack.c.l.b16 %v122
    %v326 = vunpack.c.l.b16 %v123
    %v327 = vunpack.c.l.b16 %v124
    %v328 = vunpack.c.l.b16 %v125
    %v329 = vunpack.c.l.b16 %v126
    %v330 = vunpack.c.l.b16 %v127
    %v331 = vunpack.c.l.b16 %v128
    %v332 = vunpack.c.l.b16 %v129
    %v333 = vunpack.c.l.b16 %v130
    %v334 = vunpack.c.l.b16 %v131
    %v335 = vunpack.c.l.b16 %v132
    %v336 = vunpack.c.l.b16 %v133
    %v337 = vunpack.c.l.b16 %v134
    %v338 = vunpack.c.l.b16 %v135
    %v339 = vunpack.c.l.b16 %v136
    %v340 = vunpack.c.l.b16 %v137
    %v341 = vunpack.c.l.b16 %v138
    %v342 = vunpack.c.l.b16 %v139
    %v343 = vunpack.c.l.b16 %v140
    %v344 = vunpack.c.l.b16 %v141
    %v345 = vunpack.c.l.b16 %v142
    %v346 = vunpack.c.l.b16 %v143
    %v347 = vunpack.c.l.b16 %v144
    %v348 = vunpack.c.l.b16 %v145
    %v349 = vunpack.c.l.b16 %v146
    %v350 = vpack.c.b16 %v253, %v252
    %v351 = vpack.c.b16 %v255, %v254
    %v352 = vpack.c.b16 %v257, %v256
    %v353 = vpack.c.b16 %v259, %v258
    %v354 = vpack.c.b16 %v261, %v260
    %v355 = vpack.c.b16 %v263, %v262
    %v356 = vpack.c.b16 %v265, %v264
    %v357 = vpack.c.b16 %v267, %v266
    %v358 = vpack.c.b16 %v269, %v268
    %v359 = vpack.c.b16 %v271, %v270
    %v360 = vpack.c.b16 %v273, %v272
    %v361 = vpack.c.b16 %v275, %v274
    %v362 = vpack.c.b16 %v277, %v276
    %v363 = vpack.c.b16 %v279, %v278
    %v364 = vpack.c.b16 %v281, %v280
    %v365 = vpack.c.b16 %v283, %v282
    %v366 = vpack.c.b16 %v285, %v284
    %v367 = vpack.c.b16 %v287, %v286
    %v368 = vpack.c.b16 %v289, %v288
    %v369 = vpack.c.b16 %v291, %v290
    %v370 = vpack.c.b16 %v293, %v292
    %v371 = vpack.c.b16 %v295, %v294
    %v372 = vpack.c.b16 %v297, %v296
    %v373 = vpack.c.b16 %v299, %v298
    %v374 = vpack.c.b16 %v301, %v300
    %v375 = vpack.c.b16 %v303, %v302
    %v376 = vpack.c.b16 %v305, %v304
    %v377 = vpack.c.b16 %v307, %v306
    %v378 = vpack.c.b16 %v309, %v308
    %v379 = vpack.c.b16 %v311, %v310
    %v380 = vpack.c.b16 %v313, %v312
    %v381 = vpack.c.b16 %v315, %v314
    %v382 = vpack.c.b16 %v317, %v316
    %v383 = vpack.c.b16 %v319, %v318
    %v384 = vpack.c.b16 %v321, %v320
    %v385 = vpack.c.b16 %v323, %v322
    %v386 = vpack.c.b16 %v325, %v324
    %v387 = vpack.c.b16 %v327, %v326
    %v388 = vpack.c.b16 %v329, %v328
    %v389 = vpack.c.b16 %v331, %v330
    %v390 = vpack.c.b16 %v333, %v332
    %v391 = vpack.c.b16 %v335, %v334
    %v392 = vpack.c.b16 %v337, %v336
    %v393 = vpack.c.b16 %v339, %v338
    %v394 = vpack.c.b16 %v341, %v340
    %v395 = vpack.c.b16 %v343, %v342
    %v396 = vpack.c.b16 %v345, %v344
    %v397 = vpack.c.b16 %v347, %v346
    %v398 = vpack.c.b16 %v349, %v348
    %vm448 = vcmask 130048
    %v450 = vsel %vm448, %v48, 0
    %452 = vmatprep.subr.bf16.mxu0 0
    %453 = vmatpush1.bf16.msra.mxu0 %v350
    %454 = vmatprep.subr.bf16.mxu0 0
    %455 = vmatpush1.bf16.msra.mxu0 %v351
    %456 = vmatprep.subr.bf16.mxu0 0
    %457 = vmatpush1.bf16.msra.mxu0 %v352
    %458 = vmatprep.subr.bf16.mxu0 0
    %459 = vmatpush1.bf16.msra.mxu0 %v353
    %460 = vmatprep.subr.bf16.mxu0 0
    %461 = vmatpush1.bf16.msra.mxu0 %v354
    %462 = vmatprep.subr.bf16.mxu0 0
    %463 = vmatpush1.bf16.msra.mxu0 %v355
    %464 = vmatprep.subr.bf16.mxu0 0
    %465 = vmatpush1.bf16.msra.mxu0 %v356
    %466 = vmatprep.subr.bf16.mxu0 0
    %467 = vmatpush1.bf16.msra.mxu0 %v357
    %468 = vmatprep.subr.bf16.mxu0 0
    %469 = vmatpush1.bf16.msra.mxu0 %v358
    %470 = vmatprep.subr.bf16.mxu0 0
    %471 = vmatpush1.bf16.msra.mxu0 %v359
    %472 = vmatprep.subr.bf16.mxu0 0
    %473 = vmatpush1.bf16.msra.mxu0 %v360
    %474 = vmatprep.subr.bf16.mxu0 0
    %475 = vmatpush1.bf16.msra.mxu0 %v361
    %476 = vmatprep.subr.bf16.mxu0 0
    %477 = vmatpush1.bf16.msra.mxu0 %v362
    %478 = vmatprep.subr.bf16.mxu0 0
    %479 = vmatpush1.bf16.msra.mxu0 %v363
    %480 = vmatprep.subr.bf16.mxu0 0
    %481 = vmatpush1.bf16.msra.mxu0 %v364
    %482 = vmatprep.subr.bf16.mxu0 0
    %483 = vmatpush1.bf16.msra.mxu0 %v365
    %484 = vmatprep.mubr.bf16.mxu0 %v43
    %485 = vmatmul.mubr.bf16.gmra.mrb[0].mxu0 %v42
    %v486 = vpop.f32.mrb[0].mxu0
    %v487 = vadd.f32 %v152, %v486
    %v488 = vpop.f32.mrb[0].mxu0
    %v489 = vpop.f32.mrb[0].mxu0
    %v490 = vadd.f32 %v152, %v489
    %v491 = vpop.f32.mrb[0].mxu0
    %492 = vdwg.mxu0
    %493 = vmatprep.subr.bf16.mxu0 0
    %494 = vmatpush1.bf16.msra.mxu0 %v366
    %495 = vmatprep.subr.bf16.mxu0 0
    %496 = vmatpush1.bf16.msra.mxu0 %v367
    %497 = vmatprep.subr.bf16.mxu0 0
    %498 = vmatpush1.bf16.msra.mxu0 %v368
    %499 = vmatprep.subr.bf16.mxu0 0
    %500 = vmatpush1.bf16.msra.mxu0 %v369
    %501 = vmatprep.subr.bf16.mxu0 0
    %502 = vmatpush1.bf16.msra.mxu0 %v370
    %503 = vmatprep.subr.bf16.mxu0 0
    %504 = vmatpush1.bf16.msra.mxu0 %v371
    %505 = vmatprep.subr.bf16.mxu0 0
    %506 = vmatpush1.bf16.msra.mxu0 %v372
    %507 = vmatprep.subr.bf16.mxu0 0
    %508 = vmatpush1.bf16.msra.mxu0 %v373
    %509 = vmatprep.subr.bf16.mxu0 0
    %510 = vmatpush1.bf16.msra.mxu0 %v374
    %511 = vmatprep.subr.bf16.mxu0 0
    %512 = vmatpush1.bf16.msra.mxu0 %v375
    %513 = vmatprep.subr.bf16.mxu0 0
    %514 = vmatpush1.bf16.msra.mxu0 %v376
    %515 = vmatprep.subr.bf16.mxu0 0
    %516 = vmatpush1.bf16.msra.mxu0 %v377
    %517 = vmatprep.subr.bf16.mxu0 0
    %518 = vmatpush1.bf16.msra.mxu0 %v378
    %519 = vmatprep.subr.bf16.mxu0 0
    %520 = vmatpush1.bf16.msra.mxu0 %v379
    %521 = vmatprep.subr.bf16.mxu0 0
    %522 = vmatpush1.bf16.msra.mxu0 %v380
    %523 = vmatprep.subr.bf16.mxu0 0
    %524 = vmatpush1.bf16.msra.mxu0 %v381
    %525 = vmatprep.mubr.bf16.mxu0 %v45
    %526 = vmatmul.mubr.bf16.gmra.mrb[0].mxu0 %v44
    %v527 = vpop.f32.mrb[0].mxu0
    %v528 = vadd.f32 %v487, %v527
    %v529 = vpop.f32.mrb[0].mxu0
    %v530 = vpop.f32.mrb[0].mxu0
    %v531 = vadd.f32 %v490, %v530
    %v532 = vpop.f32.mrb[0].mxu0
    %533 = vdwg.mxu0
    %534 = vmatprep.subr.bf16.mxu0 0
    %535 = vmatpush1.bf16.msra.mxu0 %v382
    %536 = vmatprep.subr.bf16.mxu0 0
    %537 = vmatpush1.bf16.msra.mxu0 %v383
    %538 = vmatprep.subr.bf16.mxu0 0
    %539 = vmatpush1.bf16.msra.mxu0 %v384
    %540 = vmatprep.subr.bf16.mxu0 0
    %541 = vmatpush1.bf16.msra.mxu0 %v385
    %542 = vmatprep.subr.bf16.mxu0 0
    %543 = vmatpush1.bf16.msra.mxu0 %v386
    %544 = vmatprep.subr.bf16.mxu0 0
    %545 = vmatpush1.bf16.msra.mxu0 %v387
    %546 = vmatprep.subr.bf16.mxu0 0
    %547 = vmatpush1.bf16.msra.mxu0 %v388
    %548 = vmatprep.subr.bf16.mxu0 0
    %549 = vmatpush1.bf16.msra.mxu0 %v389
    %550 = vmatprep.subr.bf16.mxu0 0
    %551 = vmatpush1.bf16.msra.mxu0 %v390
    %552 = vmatprep.subr.bf16.mxu0 0
    %553 = vmatpush1.bf16.msra.mxu0 %v391
    %554 = vmatprep.subr.bf16.mxu0 0
    %555 = vmatpush1.bf16.msra.mxu0 %v392
    %556 = vmatprep.subr.bf16.mxu0 0
    %557 = vmatpush1.bf16.msra.mxu0 %v393
    %558 = vmatprep.subr.bf16.mxu0 0
    %559 = vmatpush1.bf16.msra.mxu0 %v394
    %560 = vmatprep.subr.bf16.mxu0 0
    %561 = vmatpush1.bf16.msra.mxu0 %v395
    %562 = vmatprep.subr.bf16.mxu0 0
    %563 = vmatpush1.bf16.msra.mxu0 %v396
    %564 = vmatprep.subr.bf16.mxu0 0
    %565 = vmatpush1.bf16.msra.mxu0 %v397
    %566 = vmatprep.mubr.bf16.mxu0 %v47
    %567 = vmatmul.mubr.bf16.gmra.mrb[0].mxu0 %v46
    %v568 = vpop.f32.mrb[0].mxu0
    %v569 = vadd.f32 %v528, %v568
    %v570 = vpop.f32.mrb[0].mxu0
    %v571 = vpop.f32.mrb[0].mxu0
    %v572 = vadd.f32 %v531, %v571
    %v573 = vpop.f32.mrb[0].mxu0
    %574 = vdwg.mxu0
    %575 = vmatprep.subr.bf16.mxu0 0
    %576 = vmatpush1.bf16.msra.mxu0 %v398
    %577 = vmatprep.subr.bf16.mxu0 0
    %578 = vmatpush1.bf16.msra.mxu0 0
    %579 = vmatprep.subr.bf16.mxu0 0
    %580 = vmatpush1.bf16.msra.mxu0 0
    %581 = vmatprep.subr.bf16.mxu0 0
    %582 = vmatpush1.bf16.msra.mxu0 0
    %583 = vmatprep.subr.bf16.mxu0 0
    %584 = vmatpush1.bf16.msra.mxu0 0
    %585 = vmatprep.subr.bf16.mxu0 0
    %586 = vmatpush1.bf16.msra.mxu0 0
    %587 = vmatprep.subr.bf16.mxu0 0
    %588 = vmatpush1.bf16.msra.mxu0 0
    %589 = vmatprep.subr.bf16.mxu0 0
    %590 = vmatpush1.bf16.msra.mxu0 0
    %591 = vmatprep.subr.bf16.mxu0 0
    %592 = vmatpush1.bf16.msra.mxu0 0
    %593 = vmatprep.subr.bf16.mxu0 0
    %594 = vmatpush1.bf16.msra.mxu0 0
    %595 = vmatprep.subr.bf16.mxu0 0
    %596 = vmatpush1.bf16.msra.mxu0 0
    %597 = vmatprep.subr.bf16.mxu0 0
    %598 = vmatpush1.bf16.msra.mxu0 0
    %599 = vmatprep.subr.bf16.mxu0 0
    %600 = vmatpush1.bf16.msra.mxu0 0
    %601 = vmatprep.subr.bf16.mxu0 0
    %602 = vmatpush1.bf16.msra.mxu0 0
    %603 = vmatprep.subr.bf16.mxu0 0
    %604 = vmatpush1.bf16.msra.mxu0 0
    %605 = vmatprep.subr.bf16.mxu0 0
    %606 = vmatpush1.bf16.msra.mxu0 0
    %607 = vmatprep.mubr.bf16.mxu0 0
    %608 = vmatmul.mubr.bf16.gmra.mrb[0].mxu0 %v450
    %v609 = vpop.f32.mrb[0].mxu0
    %v610 = vadd.f32 %v569, %v609
    %v611 = vpop.f32.mrb[0].mxu0
    %v612 = vpop.f32.mrb[0].mxu0
    %v613 = vadd.f32 %v572, %v612
    %v614 = vpop.f32.mrb[0].mxu0
    %615 = vdwg.mxu0
    %v616 = vmax.f32 %v610, 0.0
    %v617 = vmax.f32 %v613, 0.0
    %v618 = vpack.c.bf16 %v617, %v616
    %v619 = vld [vmem:[%s3] sm:$0xf]
    %v620 = vld [vmem:[%s3 + $0x4] sm:$0xf]
    %v621 = vld [vmem:[%s3 + $0x8] sm:$0xf]
    %v622 = vld [vmem:[%s3 + $0xc] sm:$0xf]
    %v623 = vld [vmem:[%s3 + $0x10] sm:$0xf]
    %v624 = vld [vmem:[%s3 + $0x14] sm:$0xf]
    %v625 = vld [vmem:[%s3 + $0x18] sm:$0xf]
    %v626 = vld [vmem:[%s3 + $0x1c] sm:$0xf]
    %v627 = vld [vmem:[%s3 + $0x20] sm:$0xf]
    %v628 = vld [vmem:[%s3 + $0x24] sm:$0xf]
    %v629 = vld [vmem:[%s3 + $0x28] sm:$0xf]
    %v630 = vld [vmem:[%s3 + $0x2c] sm:$0xf]
    %v631 = vld [vmem:[%s3 + $0x30] sm:$0xf]
    %v632 = vld [vmem:[%s3 + $0x34] sm:$0xf]
    %v633 = vld [vmem:[%s3 + $0x38] sm:$0xf]
    %v634 = vld [vmem:[%s3 + $0x3c] sm:$0xf]
    %v635 = vld [vmem:[%s4] sm:$0x1]
    %v637 = vlaneseq
    %v638 = vshrl.u32 %v637, 7
    %v639 = vsub.s32 0, %v638
    %v640 = vrot.slane %v635, %v639
    %v658 = vunpack.c.l.b16 %v619
    %v659 = vunpack.c.l.b16 %v620
    %v660 = vunpack.c.l.b16 %v621
    %v661 = vunpack.c.l.b16 %v622
    %v662 = vunpack.c.l.b16 %v623
    %v663 = vunpack.c.l.b16 %v624
    %v664 = vunpack.c.l.b16 %v625
    %v665 = vunpack.c.l.b16 %v626
    %v666 = vunpack.c.l.b16 %v627
    %v667 = vunpack.c.l.b16 %v628
    %v668 = vunpack.c.l.b16 %v629
    %v669 = vunpack.c.l.b16 %v630
    %v670 = vunpack.c.l.b16 %v631
    %v671 = vunpack.c.l.b16 %v632
    %v672 = vunpack.c.l.b16 %v633
    %v673 = vunpack.c.l.b16 %v634
    %v674 = vpack.c.b16 %v659, %v658
    %v675 = vpack.c.b16 %v661, %v660
    %v676 = vpack.c.b16 %v663, %v662
    %v677 = vpack.c.b16 %v665, %v664
    %v678 = vpack.c.b16 %v667, %v666
    %v679 = vpack.c.b16 %v669, %v668
    %v680 = vpack.c.b16 %v671, %v670
    %v681 = vpack.c.b16 %v673, %v672
    %690 = vmatprep.subr.bf16.mxu0 0
    %691 = vmatpush1.bf16.msra.mxu0 %v674
    %692 = vmatprep.subr.bf16.mxu0 0
    %693 = vmatpush1.bf16.msra.mxu0 %v675
    %694 = vmatprep.subr.bf16.mxu0 0
    %695 = vmatpush1.bf16.msra.mxu0 %v676
    %696 = vmatprep.subr.bf16.mxu0 0
    %697 = vmatpush1.bf16.msra.mxu0 %v677
    %698 = vmatprep.subr.bf16.mxu0 0
    %699 = vmatpush1.bf16.msra.mxu0 %v678
    %700 = vmatprep.subr.bf16.mxu0 0
    %701 = vmatpush1.bf16.msra.mxu0 %v679
    %702 = vmatprep.subr.bf16.mxu0 0
    %703 = vmatpush1.bf16.msra.mxu0 %v680
    %704 = vmatprep.subr.bf16.mxu0 0
    %705 = vmatpush1.bf16.msra.mxu0 %v681
    %706 = vmatprep.subr.bf16.mxu0 0
    %707 = vmatpush1.bf16.msra.mxu0 0
    %708 = vmatprep.subr.bf16.mxu0 0
    %709 = vmatpush1.bf16.msra.mxu0 0
    %710 = vmatprep.subr.bf16.mxu0 0
    %711 = vmatpush1.bf16.msra.mxu0 0
    %712 = vmatprep.subr.bf16.mxu0 0
    %713 = vmatpush1.bf16.msra.mxu0 0
    %714 = vmatprep.subr.bf16.mxu0 0
    %715 = vmatpush1.bf16.msra.mxu0 0
    %716 = vmatprep.subr.bf16.mxu0 0
    %717 = vmatpush1.bf16.msra.mxu0 0
    %718 = vmatprep.subr.bf16.mxu0 0
    %719 = vmatpush1.bf16.msra.mxu0 0
    %720 = vmatprep.subr.bf16.mxu0 0
    %721 = vmatpush1.bf16.msra.mxu0 0
    %722 = vmatprep.mubr.bf16.mxu0 0
    %723 = vmatmul.mubr.bf16.gmra.mrb[0].mxu0 %v618
    %v724 = vpop.f32.mrb[0].mxu0
    %v725 = vadd.f32 %v640, %v724
    %v726 = vpop.f32.mrb[0].mxu0
    %v727 = vpop.f32.mrb[0].mxu0
    %v728 = vadd.f32 %v640, %v727
    %v729 = vpop.f32.mrb[0].mxu0
    %730 = vdwg.mxu0
    %v731 = vmax.f32 %v725, 0.0
    %v732 = vmax.f32 %v728, 0.0
    %v733 = vpack.c.bf16 %v732, %v731
    %v734 = vld [vmem:[%s5] sm:$0xf]
    %v735 = vld [vmem:[%s5 + $0x4] sm:$0xf]
    %v736 = vld [vmem:[%s5 + $0x8] sm:$0xf]
    %v737 = vld [vmem:[%s5 + $0xc] sm:$0xf]
    %v738 = vld [vmem:[%s5 + $0x10] sm:$0xf]
    %v739 = vld [vmem:[%s5 + $0x14] sm:$0xf]
    %v740 = vld [vmem:[%s5 + $0x18] sm:$0xf]
    %v741 = vld [vmem:[%s5 + $0x1c] sm:$0xf]
    %v742 = vld [vmem:[%s6] sm:$0x1]
    %v744 = vlaneseq
    %v745 = vshrl.u32 %v744, 7
    %v746 = vsub.s32 0, %v745
    %v747 = vrot.slane %v742, %v746
    %v757 = vunpack.c.l.b16 %v734
    %v758 = vunpack.c.l.b16 %v735
    %v759 = vunpack.c.l.b16 %v736
    %v760 = vunpack.c.l.b16 %v737
    %v761 = vunpack.c.l.b16 %v738
    %v762 = vunpack.c.l.b16 %v739
    %v763 = vunpack.c.l.b16 %v740
    %v764 = vunpack.c.l.b16 %v741
    %v765 = vpack.c.b16 %v758, %v757
    %v766 = vpack.c.b16 %v760, %v759
    %v767 = vpack.c.b16 %v762, %v761
    %v768 = vpack.c.b16 %v764, %v763
    %vm773 = vcmask 523264
    %v775 = vsel %vm773, %v733, 0
    %777 = vmatprep.subr.bf16.mxu0 0
    %778 = vmatpush1.bf16.msra.mxu0 %v765
    %779 = vmatprep.subr.bf16.mxu0 0
    %780 = vmatpush1.bf16.msra.mxu0 %v766
    %781 = vmatprep.subr.bf16.mxu0 0
    %782 = vmatpush1.bf16.msra.mxu0 %v767
    %783 = vmatprep.subr.bf16.mxu0 0
    %784 = vmatpush1.bf16.msra.mxu0 %v768
    %785 = vmatprep.subr.bf16.mxu0 0
    %786 = vmatpush1.bf16.msra.mxu0 0
    %787 = vmatprep.subr.bf16.mxu0 0
    %788 = vmatpush1.bf16.msra.mxu0 0
    %789 = vmatprep.subr.bf16.mxu0 0
    %790 = vmatpush1.bf16.msra.mxu0 0
    %791 = vmatprep.subr.bf16.mxu0 0
    %792 = vmatpush1.bf16.msra.mxu0 0
    %793 = vmatprep.subr.bf16.mxu0 0
    %794 = vmatpush1.bf16.msra.mxu0 0
    %795 = vmatprep.subr.bf16.mxu0 0
    %796 = vmatpush1.bf16.msra.mxu0 0
    %797 = vmatprep.subr.bf16.mxu0 0
    %798 = vmatpush1.bf16.msra.mxu0 0
    %799 = vmatprep.subr.bf16.mxu0 0
    %800 = vmatpush1.bf16.msra.mxu0 0
    %801 = vmatprep.subr.bf16.mxu0 0
    %802 = vmatpush1.bf16.msra.mxu0 0
    %803 = vmatprep.subr.bf16.mxu0 0
    %804 = vmatpush1.bf16.msra.mxu0 0
    %805 = vmatprep.subr.bf16.mxu0 0
    %806 = vmatpush1.bf16.msra.mxu0 0
    %807 = vmatprep.subr.bf16.mxu0 0
    %808 = vmatpush1.bf16.msra.mxu0 0
    %809 = vmatprep.mubr.bf16.mxu0 0
    %810 = vmatmul.mubr.bf16.gmra.mrb[0].mxu0 %v775
    %v811 = vpop.f32.mrb[0].mxu0
    %v812 = vadd.f32 %v747, %v811
    %v813 = vpop.f32.mrb[0].mxu0
    %v814 = vpop.f32.mrb[0].mxu0
    %v815 = vadd.f32 %v747, %v814
    %v816 = vpop.f32.mrb[0].mxu0
    %817 = vdwg.mxu0
    %vm818 = vcmask 80896
    %819 = vst.msk [vmem:[#allocation2] sm:$0xff] %vm818, %v812
    %820 = vst.msk [vmem:[#allocation2 + $0x8] sm:$0xff] %vm818, %v815
    // Predicated region
    $region30: #{mnist_classifier_forward.1} parent=1 // pred_check
      _
    $region31: #{mnist_classifier_forward.1} parent=1 // pred_check_branch
      %822 = sbr.rel (0) target = $region33
    $region32: #{mnist_classifier_forward.1} parent=1 // pred_region
      %s824 = ssub.s32 256, 128
      %825 = vsyncadd [#allocation3], %s824
      %s826 = sshll.u32 [#allocation2], 4
      %s827 = int_to_ptr.vmem [resolvable:$true] %s826
      %832 = dma.vmem_to_hbm [thread:$0]  %s827, 128, %s7, [#allocation3], 128, 128, 8
    $region33: #{mnist_classifier_forward.1} parent=1 // pred_fallthru
      _
    // Predicated region
    $region34: #{mnist_classifier_forward.1} parent=1 // pred_check
      _
    $region35: #{mnist_classifier_forward.1} parent=1 // pred_check_branch
      %834 = sbr.rel (0) target = $region37
    $region36: #{mnist_classifier_forward.1} parent=1 // pred_region
      %835 = dma.done [#allocation3], 256
    $region37: #{mnist_classifier_forward.1} parent=1 // pred_fallthru
      _
    %836 = vsyncpa [#allocation3], 1

</llo_original>
